<compile_context>
chip_gen: v6e
topology: v6e:2x2x1
jax: 0.10.0
libtpu: 0.0.40
codegen_flags: <defaults>
</compile_context>

<pallas_src>
import functools

import jax
import jax.numpy as jnp
from jax.experimental import pallas as pl
from jax.experimental.pallas import tpu as pltpu


def _round_up(x, m):
    return (x + m - 1) // m * m


def _resblock_kernel(x_ref, m_ref, w1_ref, b1_ref, w2_ref, b2_ref, o_ref,
                     stack_ref, h_ref, *, offsets, negative_slope):
    # x_ref   : (NB, CP, LE)     flat padded input frames (zero pad ring of 2)
    # m_ref   : (1,  LE)         interior mask (1 on the valid H x W pixels)
    # w*_ref  : (CP, 9*CP)       packed conv weights [c_out, tap*CP + c_in]
    # b*_ref  : (CP, 1)          biases (conv2 bias pre-scaled by res_scale)
    # o_ref   : (NB, CP, LE)     output frames (interior extracted on the host)
    # stack_ref: (9*CP, NB*LE)   stacked shifted taps (matmul RHS), VMEM scratch
    # h_ref   : (CP, NB*LE)      conv1 / conv2 raw outputs, VMEM scratch
    nb, cp, le = x_ref.shape
    zpad = jnp.zeros((cp, 128), jnp.float32)     # hoisted (not re-built per iter)

    # ---- conv1: build the depth-9*CP stacked operand, one matmul ----
    for b in range(nb):
        xe = jnp.concatenate([zpad, x_ref[b], zpad], axis=1)      # (CP, LE+256)
        for t, d in enumerate(offsets):
            # tap[:, p] = frame[:, p + d]; out-of-frame reads hit the zero guard
            stack_ref[t * cp:(t + 1) * cp, b * le:(b + 1) * le] = \
                xe[:, 128 + d: 128 + d + le]
    h_ref[...] = jnp.dot(w1_ref[...], stack_ref[...],
                         preferred_element_type=jnp.float32)

    # ---- bias + LeakyReLU + interior mask, then conv2 stacked operand ----
    for b in range(nb):
        hb = h_ref[:, b * le:(b + 1) * le] + b1_ref[...]
        hb = jnp.maximum(hb, negative_slope * hb)                 # LeakyReLU(0.2)
        hb = hb * m_ref[...]          # zero outside the valid interior == the
                                      # zero padding conv2 expects
        he = jnp.concatenate([zpad, hb, zpad], axis=1)            # (CP, LE+256)
        for t, d in enumerate(offsets):
            stack_ref[t * cp:(t + 1) * cp, b * le:(b + 1) * le] = \
                he[:, 128 + d: 128 + d + le]
    # res_scale is folded into w2/b2 on the host
    h_ref[...] = jnp.dot(w2_ref[...], stack_ref[...],
                         preferred_element_type=jnp.float32)

    # ---- bias + residual (x re-read from VMEM, not held live) ----
    for b in range(nb):
        o_ref[b] = h_ref[:, b * le:(b + 1) * le] + b2_ref[...] + x_ref[b]


def resblock_forward(x, w1, b1, w2, b2, *, res_scale=1.0, negative_slope=0.2):
    """Pallas TPU implementation of ResBlock.forward (stride=1, no downsample)."""
    B, C, H, W = x.shape
    C_out, C_in, KH, KW = w1.shape
    assert (KH, KW) == (3, 3) and C_in == C
    assert w2.shape == (C_out, C_out, 3, 3)
    assert C_out == C, "residual add requires in_channels == out_channels"
    assert 0.0 <= negative_slope <= 1.0

    H2, W2 = H + 4, W + 4                 # spatial frame padded by 2 each side
    L2 = H2 * W2                          # flat frame length
    LE = _round_up(L2, 128)               # lane-dense frame segment length
    CP = _round_up(max(C, 1), 8)          # channels -> full f32 sublane group
    # Whole-frame / whole-channel-in-VMEM design envelope (see TODO at top).
    assert CP <= 16 and LE <= 2048, "shape needs channel/spatial tiling (TODO)"
    # Correctness of the flat-shift trick relies on spatial pad (2) >= max kw
    # shift (1), true for 3x3 kernels with padding=1.

    f32 = jnp.float32

    # ---- batch blocking: NB frames per grid step ----
    # per-frame VMEM: x + out double-buffered (4x) + stack (9x) + h (1x)
    per_frame_vmem = 14 * CP * LE * 4
    nb_cap = max(1, min(B,
                        (6 * 1024 * 1024) // per_frame_vmem,   # VMEM budget (fits v7x)
                        max(1, 4096 // LE)))                   # bound matmul-N vregs
    num_steps = pl.cdiv(B, nb_cap)
    if B >= 2 and num_steps < 2:
        num_steps = 2                    # keep both v7x TensorCores busy
    NB = pl.cdiv(B, num_steps)
    num_steps = pl.cdiv(B, NB)
    B_pad = NB * num_steps

    # ---- host-side packing (cheap XLA preprocessing) ----
    x32 = x.astype(f32)
    xp = jnp.pad(x32, ((0, B_pad - B), (0, CP - C), (2, 2), (2, 2)))  # (Bp,CP,H2,W2)
    x_seg = jnp.pad(xp.reshape(B_pad, CP, L2), ((0, 0), (0, 0), (0, LE - L2)))

    mask2d = jnp.zeros((H2, W2), f32).at[2:2 + H, 2:2 + W].set(1.0)
    mask = jnp.pad(mask2d.reshape(-1), (0, LE - L2)).reshape(1, LE)

    def pack_w(w, scale):
        wp = jnp.pad(w.astype(f32) * scale,
                     ((0, CP - C), (0, CP - C), (0, 0), (0, 0)))
        # [co, ci, kh, kw] -> [co, (kh*3+kw)*CP + ci]   (lane-dense (CP, 9*CP))
        return jnp.transpose(wp, (0, 2, 3, 1)).reshape(CP, 9 * CP)

    w1p = pack_w(w1, 1.0)
    w2p = pack_w(w2, float(res_scale))                       # fold res_scale
    b1p = jnp.pad(b1.astype(f32), (0, CP - C)).reshape(CP, 1)
    b2p = (jnp.pad(b2.astype(f32), (0, CP - C)) * float(res_scale)).reshape(CP, 1)

    # tap (kh, kw) -> flat offset in the padded frame (row stride = W2)
    offsets = tuple((kh - 1) * W2 + (kw - 1)
                    for kh in range(3) for kw in range(3))

    kernel = functools.partial(_resblock_kernel, offsets=offsets,
                               negative_slope=float(negative_slope))

    out_seg = pl.pallas_call(
        kernel,
        out_shape=jax.ShapeDtypeStruct((B_pad, CP, LE), f32),
        grid_spec=pltpu.PrefetchScalarGridSpec(
            num_scalar_prefetch=0,
            grid=(num_steps,),
            in_specs=[
                pl.BlockSpec((NB, CP, LE), lambda s: (s, 0, 0)),   # x frames
                pl.BlockSpec((1, LE), lambda s: (0, 0)),           # interior mask
                pl.BlockSpec((CP, 9 * CP), lambda s: (0, 0)),      # conv1 weights
                pl.BlockSpec((CP, 1), lambda s: (0, 0)),           # conv1 bias
                pl.BlockSpec((CP, 9 * CP), lambda s: (0, 0)),      # conv2 weights
                pl.BlockSpec((CP, 1), lambda s: (0, 0)),           # conv2 bias
            ],
            out_specs=pl.BlockSpec((NB, CP, LE), lambda s: (s, 0, 0)),
            scratch_shapes=[
                pltpu.VMEM((9 * CP, NB * LE), f32),   # stacked tap operand
                pltpu.VMEM((CP, NB * LE), f32),       # conv1/conv2 raw output
            ],
        ),
        compiler_params=pltpu.CompilerParams(
            dimension_semantics=("parallel",)),
    )(x_seg, mask, w1p, b1p, w2p, b2p)

    # drop channel / frame padding, extract the valid H x W interior
    # TODO(synk): fold this crop into the output layout (W on lanes) to avoid
    #             one extra HBM pass on large frames.
    out = out_seg[:B, :C, :L2].reshape(B, C, H2, W2)[:, :, 2:2 + H, 2:2 + W]
    return out


def _reference(x, w1, b1, w2, b2, res_scale=1.0, negative_slope=0.2):
    """Pure-JAX reference of the ResBlock forward (for verification)."""
    dn = ('NCHW', 'OIHW', 'NCHW')

    def conv(a, w):
        return jax.lax.conv_general_dilated(
            a, w, (1, 1), ((1, 1), (1, 1)), dimension_numbers=dn,
            precision=jax.lax.Precision.HIGHEST)

    h = conv(x, w1) + b1[None, :, None, None]
    h = jnp.where(h >= 0, h, negative_slope * h)
    y = conv(h, w2) + b2[None, :, None, None]
    return y * res_scale + x


if __name__ == "__main__":
    key = jax.random.PRNGKey(0)
    ks = jax.random.split(key, 5)

    B, C, H, W = 2, 4, 16, 16
    x = jax.random.normal(ks[0], (B, C, H, W), dtype=jnp.float32)
    w1 = jax.random.normal(ks[1], (C, C, 3, 3), dtype=jnp.float32) * 0.2
    b1 = jax.random.normal(ks[2], (C,), dtype=jnp.float32) * 0.1
    w2 = jax.random.normal(ks[3], (C, C, 3, 3), dtype=jnp.float32) * 0.2
    b2 = jax.random.normal(ks[4], (C,), dtype=jnp.float32) * 0.1

    out = resblock_forward(x, w1, b1, w2, b2, res_scale=1.0)
    out = jax.block_until_ready(out)

    ref = _reference(x, w1, b1, w2, b2, res_scale=1.0)
    assert out.shape == (B, C, H, W), out.shape
    err = float(jnp.max(jnp.abs(out - ref)))
    assert err < 1e-3, f"mismatch vs reference: max abs err = {err}"

    print("KERNEL_OK")
</pallas_src>

<mosaic_0001>
module attributes {stable_mosaic.version = 11 : i64} {
  func.func @_resblock_kernel(%arg0: i32, %arg1: memref<1x8x512xf32, #tpu.memory_space<vmem>>, %arg2: memref<1x512xf32, #tpu.memory_space<vmem>>, %arg3: memref<8x72xf32, #tpu.memory_space<vmem>>, %arg4: memref<8x1xf32, #tpu.memory_space<vmem>>, %arg5: memref<8x72xf32, #tpu.memory_space<vmem>>, %arg6: memref<8x1xf32, #tpu.memory_space<vmem>>, %arg7: memref<1x8x512xf32, #tpu.memory_space<vmem>>, %arg8: memref<72x512xf32, #tpu.memory_space<vmem>>, %arg9: memref<8x512xf32, #tpu.memory_space<vmem>>) attributes {dimension_semantics = [#tpu.dimension_semantics<parallel>], iteration_bounds = array<i64: 2>, scalar_prefetch = 0 : i64, scratch_operands = 2 : i64, tpu.core_type = #tpu.core_type<tc>, window_params = [{transform_indices = @transform_0, window_bounds = array<i64: 1, 8, 512>}, {pipeline_mode = #tpu.pipeline_mode<synchronous>, transform_indices = @transform_1, window_bounds = array<i64: 1, 512>}, {pipeline_mode = #tpu.pipeline_mode<synchronous>, transform_indices = @transform_2, window_bounds = array<i64: 8, 72>}, {pipeline_mode = #tpu.pipeline_mode<synchronous>, transform_indices = @transform_3, window_bounds = array<i64: 8, 1>}, {pipeline_mode = #tpu.pipeline_mode<synchronous>, transform_indices = @transform_4, window_bounds = array<i64: 8, 72>}, {pipeline_mode = #tpu.pipeline_mode<synchronous>, transform_indices = @transform_5, window_bounds = array<i64: 8, 1>}, {transform_indices = @transform_6, window_bounds = array<i64: 1, 8, 512>}]} {
    %cst = arith.constant 0.000000e+00 : f32
    %0 = vector.broadcast %cst : f32 to vector<8x128xf32>
    %c0 = arith.constant 0 : index
    %c0_0 = arith.constant 0 : index
    %c0_1 = arith.constant 0 : index
    %1 = vector.load %arg1[%c0, %c0_0, %c0_1] : memref<1x8x512xf32, #tpu.memory_space<vmem>>, vector<1x8x512xf32>
    %2 = vector.shape_cast %1 : vector<1x8x512xf32> to vector<8x512xf32>
    %3 = tpu.concatenate %0, %2, %0 in 1 : vector<8x128xf32>, vector<8x512xf32>, vector<8x128xf32> -> vector<8x768xf32>
    %4 = vector.extract_strided_slice %3 {offsets = [0, 107], sizes = [8, 512], strides = [1, 1]} : vector<8x768xf32> to vector<8x512xf32>
    %c0_2 = arith.constant 0 : index
    %c0_3 = arith.constant 0 : index
    %5 = vector.load %arg8[%c0_2, %c0_3] : memref<72x512xf32, #tpu.memory_space<vmem>>, vector<8x512xf32>
    tpu.vector_store %arg8[%c0_2, %c0_3], %4 {strides = array<i32>} : memref<72x512xf32, #tpu.memory_space<vmem>>, vector<8x512xf32>,
    %6 = vector.extract_strided_slice %3 {offsets = [0, 108], sizes = [8, 512], strides = [1, 1]} : vector<8x768xf32> to vector<8x512xf32>
    %c8 = arith.constant 8 : index
    %c0_4 = arith.constant 0 : index
    %7 = vector.load %arg8[%c8, %c0_4] : memref<72x512xf32, #tpu.memory_space<vmem>>, vector<8x512xf32>
    tpu.vector_store %arg8[%c8, %c0_4], %6 {strides = array<i32>} : memref<72x512xf32, #tpu.memory_space<vmem>>, vector<8x512xf32>,
    %8 = vector.extract_strided_slice %3 {offsets = [0, 109], sizes = [8, 512], strides = [1, 1]} : vector<8x768xf32> to vector<8x512xf32>
    %c16 = arith.constant 16 : index
    %c0_5 = arith.constant 0 : index
    %9 = vector.load %arg8[%c16, %c0_5] : memref<72x512xf32, #tpu.memory_space<vmem>>, vector<8x512xf32>
    tpu.vector_store %arg8[%c16, %c0_5], %8 {strides = array<i32>} : memref<72x512xf32, #tpu.memory_space<vmem>>, vector<8x512xf32>,
    %10 = vector.extract_strided_slice %3 {offsets = [0, 127], sizes = [8, 512], strides = [1, 1]} : vector<8x768xf32> to vector<8x512xf32>
    %c24 = arith.constant 24 : index
    %c0_6 = arith.constant 0 : index
    %11 = vector.load %arg8[%c24, %c0_6] : memref<72x512xf32, #tpu.memory_space<vmem>>, vector<8x512xf32>
    tpu.vector_store %arg8[%c24, %c0_6], %10 {strides = array<i32>} : memref<72x512xf32, #tpu.memory_space<vmem>>, vector<8x512xf32>,
    %12 = vector.extract_strided_slice %3 {offsets = [0, 128], sizes = [8, 512], strides = [1, 1]} : vector<8x768xf32> to vector<8x512xf32>
    %c32 = arith.constant 32 : index
    %c0_7 = arith.constant 0 : index
    %13 = vector.load %arg8[%c32, %c0_7] : memref<72x512xf32, #tpu.memory_space<vmem>>, vector<8x512xf32>
    tpu.vector_store %arg8[%c32, %c0_7], %12 {strides = array<i32>} : memref<72x512xf32, #tpu.memory_space<vmem>>, vector<8x512xf32>,
    %14 = vector.extract_strided_slice %3 {offsets = [0, 129], sizes = [8, 512], strides = [1, 1]} : vector<8x768xf32> to vector<8x512xf32>
    %c40 = arith.constant 40 : index
    %c0_8 = arith.constant 0 : index
    %15 = vector.load %arg8[%c40, %c0_8] : memref<72x512xf32, #tpu.memory_space<vmem>>, vector<8x512xf32>
    tpu.vector_store %arg8[%c40, %c0_8], %14 {strides = array<i32>} : memref<72x512xf32, #tpu.memory_space<vmem>>, vector<8x512xf32>,
    %16 = vector.extract_strided_slice %3 {offsets = [0, 147], sizes = [8, 512], strides = [1, 1]} : vector<8x768xf32> to vector<8x512xf32>
    %c48 = arith.constant 48 : index
    %c0_9 = arith.constant 0 : index
    %17 = vector.load %arg8[%c48, %c0_9] : memref<72x512xf32, #tpu.memory_space<vmem>>, vector<8x512xf32>
    tpu.vector_store %arg8[%c48, %c0_9], %16 {strides = array<i32>} : memref<72x512xf32, #tpu.memory_space<vmem>>, vector<8x512xf32>,
    %18 = vector.extract_strided_slice %3 {offsets = [0, 148], sizes = [8, 512], strides = [1, 1]} : vector<8x768xf32> to vector<8x512xf32>
    %c56 = arith.constant 56 : index
    %c0_10 = arith.constant 0 : index
    %19 = vector.load %arg8[%c56, %c0_10] : memref<72x512xf32, #tpu.memory_space<vmem>>, vector<8x512xf32>
    tpu.vector_store %arg8[%c56, %c0_10], %18 {strides = array<i32>} : memref<72x512xf32, #tpu.memory_space<vmem>>, vector<8x512xf32>,
    %20 = vector.extract_strided_slice %3 {offsets = [0, 149], sizes = [8, 512], strides = [1, 1]} : vector<8x768xf32> to vector<8x512xf32>
    %c64 = arith.constant 64 : index
    %c0_11 = arith.constant 0 : index
    %21 = vector.load %arg8[%c64, %c0_11] : memref<72x512xf32, #tpu.memory_space<vmem>>, vector<8x512xf32>
    tpu.vector_store %arg8[%c64, %c0_11], %20 {strides = array<i32>} : memref<72x512xf32, #tpu.memory_space<vmem>>, vector<8x512xf32>,
    %c0_12 = arith.constant 0 : index
    %c0_13 = arith.constant 0 : index
    %22 = vector.load %arg3[%c0_12, %c0_13] : memref<8x72xf32, #tpu.memory_space<vmem>>, vector<8x72xf32>
    %c0_14 = arith.constant 0 : index
    %c0_15 = arith.constant 0 : index
    %23 = vector.load %arg8[%c0_14, %c0_15] : memref<72x512xf32, #tpu.memory_space<vmem>>, vector<72x512xf32>
    %cst_16 = arith.constant dense<0.000000e+00> : vector<8x512xf32>
    %24 = tpu.matmul %22, %23, %cst_16 {dimension_numbers = #tpu.dot_dimension_numbers<[1], [0], [0], [1], [0, 0, 1, 1], [], []>} : vector<8x72xf32>, vector<72x512xf32>, vector<8x512xf32> -> vector<8x512xf32>
    %c0_17 = arith.constant 0 : index
    %c0_18 = arith.constant 0 : index
    %25 = vector.load %arg9[%c0_17, %c0_18] : memref<8x512xf32, #tpu.memory_space<vmem>>, vector<8x512xf32>
    tpu.vector_store %arg9[%c0_17, %c0_18], %24 {strides = array<i32>} : memref<8x512xf32, #tpu.memory_space<vmem>>, vector<8x512xf32>,
    %c0_19 = arith.constant 0 : index
    %c0_20 = arith.constant 0 : index
    %26 = vector.load %arg9[%c0_19, %c0_20] : memref<8x512xf32, #tpu.memory_space<vmem>>, vector<8x512xf32>
    %c0_21 = arith.constant 0 : index
    %c0_22 = arith.constant 0 : index
    %27 = vector.load %arg4[%c0_21, %c0_22] : memref<8x1xf32, #tpu.memory_space<vmem>>, vector<8x1xf32>
    %28 = vector.broadcast %27 : vector<8x1xf32> to vector<8x512xf32>
    %29 = arith.addf %26, %28 : vector<8x512xf32>
    %cst_23 = arith.constant 2.000000e-01 : f32
    %30 = vector.broadcast %cst_23 : f32 to vector<8x512xf32>
    %31 = arith.mulf %30, %29 : vector<8x512xf32>
    %32 = arith.maximumf %29, %31 : vector<8x512xf32>
    %c0_24 = arith.constant 0 : index
    %c0_25 = arith.constant 0 : index
    %33 = vector.load %arg2[%c0_24, %c0_25] : memref<1x512xf32, #tpu.memory_space<vmem>>, vector<1x512xf32>
    %34 = vector.broadcast %33 : vector<1x512xf32> to vector<8x512xf32>
    %35 = arith.mulf %32, %34 : vector<8x512xf32>
    %36 = tpu.concatenate %0, %35, %0 in 1 : vector<8x128xf32>, vector<8x512xf32>, vector<8x128xf32> -> vector<8x768xf32>
    %37 = vector.extract_strided_slice %36 {offsets = [0, 107], sizes = [8, 512], strides = [1, 1]} : vector<8x768xf32> to vector<8x512xf32>
    %c0_26 = arith.constant 0 : index
    %c0_27 = arith.constant 0 : index
    %38 = vector.load %arg8[%c0_26, %c0_27] : memref<72x512xf32, #tpu.memory_space<vmem>>, vector<8x512xf32>
    tpu.vector_store %arg8[%c0_26, %c0_27], %37 {strides = array<i32>} : memref<72x512xf32, #tpu.memory_space<vmem>>, vector<8x512xf32>,
    %39 = vector.extract_strided_slice %36 {offsets = [0, 108], sizes = [8, 512], strides = [1, 1]} : vector<8x768xf32> to vector<8x512xf32>
    %c8_28 = arith.constant 8 : index
    %c0_29 = arith.constant 0 : index
    %40 = vector.load %arg8[%c8_28, %c0_29] : memref<72x512xf32, #tpu.memory_space<vmem>>, vector<8x512xf32>
    tpu.vector_store %arg8[%c8_28, %c0_29], %39 {strides = array<i32>} : memref<72x512xf32, #tpu.memory_space<vmem>>, vector<8x512xf32>,
    %41 = vector.extract_strided_slice %36 {offsets = [0, 109], sizes = [8, 512], strides = [1, 1]} : vector<8x768xf32> to vector<8x512xf32>
    %c16_30 = arith.constant 16 : index
    %c0_31 = arith.constant 0 : index
    %42 = vector.load %arg8[%c16_30, %c0_31] : memref<72x512xf32, #tpu.memory_space<vmem>>, vector<8x512xf32>
    tpu.vector_store %arg8[%c16_30, %c0_31], %41 {strides = array<i32>} : memref<72x512xf32, #tpu.memory_space<vmem>>, vector<8x512xf32>,
    %43 = vector.extract_strided_slice %36 {offsets = [0, 127], sizes = [8, 512], strides = [1, 1]} : vector<8x768xf32> to vector<8x512xf32>
    %c24_32 = arith.constant 24 : index
    %c0_33 = arith.constant 0 : index
    %44 = vector.load %arg8[%c24_32, %c0_33] : memref<72x512xf32, #tpu.memory_space<vmem>>, vector<8x512xf32>
    tpu.vector_store %arg8[%c24_32, %c0_33], %43 {strides = array<i32>} : memref<72x512xf32, #tpu.memory_space<vmem>>, vector<8x512xf32>,
    %45 = vector.extract_strided_slice %36 {offsets = [0, 128], sizes = [8, 512], strides = [1, 1]} : vector<8x768xf32> to vector<8x512xf32>
    %c32_34 = arith.constant 32 : index
    %c0_35 = arith.constant 0 : index
    %46 = vector.load %arg8[%c32_34, %c0_35] : memref<72x512xf32, #tpu.memory_space<vmem>>, vector<8x512xf32>
    tpu.vector_store %arg8[%c32_34, %c0_35], %45 {strides = array<i32>} : memref<72x512xf32, #tpu.memory_space<vmem>>, vector<8x512xf32>,
    %47 = vector.extract_strided_slice %36 {offsets = [0, 129], sizes = [8, 512], strides = [1, 1]} : vector<8x768xf32> to vector<8x512xf32>
    %c40_36 = arith.constant 40 : index
    %c0_37 = arith.constant 0 : index
    %48 = vector.load %arg8[%c40_36, %c0_37] : memref<72x512xf32, #tpu.memory_space<vmem>>, vector<8x512xf32>
    tpu.vector_store %arg8[%c40_36, %c0_37], %47 {strides = array<i32>} : memref<72x512xf32, #tpu.memory_space<vmem>>, vector<8x512xf32>,
    %49 = vector.extract_strided_slice %36 {offsets = [0, 147], sizes = [8, 512], strides = [1, 1]} : vector<8x768xf32> to vector<8x512xf32>
    %c48_38 = arith.constant 48 : index
    %c0_39 = arith.constant 0 : index
    %50 = vector.load %arg8[%c48_38, %c0_39] : memref<72x512xf32, #tpu.memory_space<vmem>>, vector<8x512xf32>
    tpu.vector_store %arg8[%c48_38, %c0_39], %49 {strides = array<i32>} : memref<72x512xf32, #tpu.memory_space<vmem>>, vector<8x512xf32>,
    %51 = vector.extract_strided_slice %36 {offsets = [0, 148], sizes = [8, 512], strides = [1, 1]} : vector<8x768xf32> to vector<8x512xf32>
    %c56_40 = arith.constant 56 : index
    %c0_41 = arith.constant 0 : index
    %52 = vector.load %arg8[%c56_40, %c0_41] : memref<72x512xf32, #tpu.memory_space<vmem>>, vector<8x512xf32>
    tpu.vector_store %arg8[%c56_40, %c0_41], %51 {strides = array<i32>} : memref<72x512xf32, #tpu.memory_space<vmem>>, vector<8x512xf32>,
    %53 = vector.extract_strided_slice %36 {offsets = [0, 149], sizes = [8, 512], strides = [1, 1]} : vector<8x768xf32> to vector<8x512xf32>
    %c64_42 = arith.constant 64 : index
    %c0_43 = arith.constant 0 : index
    %54 = vector.load %arg8[%c64_42, %c0_43] : memref<72x512xf32, #tpu.memory_space<vmem>>, vector<8x512xf32>
    tpu.vector_store %arg8[%c64_42, %c0_43], %53 {strides = array<i32>} : memref<72x512xf32, #tpu.memory_space<vmem>>, vector<8x512xf32>,
    %c0_44 = arith.constant 0 : index
    %c0_45 = arith.constant 0 : index
    %55 = vector.load %arg5[%c0_44, %c0_45] : memref<8x72xf32, #tpu.memory_space<vmem>>, vector<8x72xf32>
    %c0_46 = arith.constant 0 : index
    %c0_47 = arith.constant 0 : index
    %56 = vector.load %arg8[%c0_46, %c0_47] : memref<72x512xf32, #tpu.memory_space<vmem>>, vector<72x512xf32>
    %cst_48 = arith.constant dense<0.000000e+00> : vector<8x512xf32>
    %57 = tpu.matmul %55, %56, %cst_48 {dimension_numbers = #tpu.dot_dimension_numbers<[1], [0], [0], [1], [0, 0, 1, 1], [], []>} : vector<8x72xf32>, vector<72x512xf32>, vector<8x512xf32> -> vector<8x512xf32>
    %c0_49 = arith.constant 0 : index
    %c0_50 = arith.constant 0 : index
    %58 = vector.load %arg9[%c0_49, %c0_50] : memref<8x512xf32, #tpu.memory_space<vmem>>, vector<8x512xf32>
    tpu.vector_store %arg9[%c0_49, %c0_50], %57 {strides = array<i32>} : memref<8x512xf32, #tpu.memory_space<vmem>>, vector<8x512xf32>,
    %c0_51 = arith.constant 0 : index
    %c0_52 = arith.constant 0 : index
    %59 = vector.load %arg9[%c0_51, %c0_52] : memref<8x512xf32, #tpu.memory_space<vmem>>, vector<8x512xf32>
    %c0_53 = arith.constant 0 : index
    %c0_54 = arith.constant 0 : index
    %60 = vector.load %arg6[%c0_53, %c0_54] : memref<8x1xf32, #tpu.memory_space<vmem>>, vector<8x1xf32>
    %61 = vector.broadcast %60 : vector<8x1xf32> to vector<8x512xf32>
    %62 = arith.addf %59, %61 : vector<8x512xf32>
    %c0_55 = arith.constant 0 : index
    %c0_56 = arith.constant 0 : index
    %c0_57 = arith.constant 0 : index
    %63 = vector.load %arg1[%c0_55, %c0_56, %c0_57] : memref<1x8x512xf32, #tpu.memory_space<vmem>>, vector<1x8x512xf32>
    %64 = vector.shape_cast %63 : vector<1x8x512xf32> to vector<8x512xf32>
    %65 = arith.addf %62, %64 : vector<8x512xf32>
    %c0_58 = arith.constant 0 : index
    %c0_59 = arith.constant 0 : index
    %c0_60 = arith.constant 0 : index
    %66 = vector.load %arg7[%c0_58, %c0_59, %c0_60] : memref<1x8x512xf32, #tpu.memory_space<vmem>>, vector<1x8x512xf32>
    %67 = vector.shape_cast %66 : vector<1x8x512xf32> to vector<8x512xf32>
    %68 = vector.shape_cast %65 : vector<8x512xf32> to vector<1x8x512xf32>
    tpu.vector_store %arg7[%c0_58, %c0_59, %c0_60], %68 {strides = array<i32>} : memref<1x8x512xf32, #tpu.memory_space<vmem>>, vector<1x8x512xf32>,
    return
  }
  func.func @transform_0(%arg0: i32) -> (i32, i32, i32) {
    %c0_i32 = arith.constant 0 : i32
    %c0_i32_0 = arith.constant 0 : i32
    %c0_i32_1 = arith.constant 0 : i32
    return %arg0, %c0_i32, %c0_i32_0 : i32, i32, i32
  }
  func.func @transform_1(%arg0: i32) -> (i32, i32) {
    %c0_i32 = arith.constant 0 : i32
    %c0_i32_0 = arith.constant 0 : i32
    %c0_i32_1 = arith.constant 0 : i32
    return %c0_i32, %c0_i32_0 : i32, i32
  }
  func.func @transform_2(%arg0: i32) -> (i32, i32) {
    %c0_i32 = arith.constant 0 : i32
    %c0_i32_0 = arith.constant 0 : i32
    %c0_i32_1 = arith.constant 0 : i32
    return %c0_i32, %c0_i32_0 : i32, i32
  }
  func.func @transform_3(%arg0: i32) -> (i32, i32) {
    %c0_i32 = arith.constant 0 : i32
    %c0_i32_0 = arith.constant 0 : i32
    %c0_i32_1 = arith.constant 0 : i32
    return %c0_i32, %c0_i32_0 : i32, i32
  }
  func.func @transform_4(%arg0: i32) -> (i32, i32) {
    %c0_i32 = arith.constant 0 : i32
    %c0_i32_0 = arith.constant 0 : i32
    %c0_i32_1 = arith.constant 0 : i32
    return %c0_i32, %c0_i32_0 : i32, i32
  }
  func.func @transform_5(%arg0: i32) -> (i32, i32) {
    %c0_i32 = arith.constant 0 : i32
    %c0_i32_0 = arith.constant 0 : i32
    %c0_i32_1 = arith.constant 0 : i32
    return %c0_i32, %c0_i32_0 : i32, i32
  }
  func.func @transform_6(%arg0: i32) -> (i32, i32, i32) {
    %c0_i32 = arith.constant 0 : i32
    %c0_i32_0 = arith.constant 0 : i32
    %c0_i32_1 = arith.constant 0 : i32
    return %arg0, %c0_i32, %c0_i32_0 : i32, i32, i32
  }
}

</mosaic_0001>

<llo_original>
// kernel: tpu_custom_call.1
$region0: #{tpu_custom_call.1}
  #allocation0 [shape = 'u32[]', space=smem, size = 0x4, offset = 0x4, fixed_abs, tag = 'smem constant byte address 0x4 - core index']
  #allocation1 [shape = 'u32[144,128]{1,0:T(1,128)}', space=vmem, size = 0x12000, scoped, tag = 'internal scratch']
  #allocation2 [shape = 'f32[72,512]{1,0:T(8,128)}', space=vmem, size = 0x24000, scoped, tag = 'scratch operand']
  #allocation3 [shape = 'f32[8,512]{1,0:T(8,128)}', space=vmem, size = 0x4000, scoped, tag = 'scratch operand']
  %s0 = inlined_call_operand.hbm [shape: f32[2,8,512], index: 0, kind: input, shape index: {}]
  %s1 = inlined_call_operand.hbm [shape: f32[1,512], index: 1, kind: input, shape index: {}]
  %s2 = inlined_call_operand.vmem [shape: f32[8,72], index: 2, kind: input, shape index: {}]
  %s3 = inlined_call_operand.vmem [shape: f32[8,1], index: 3, kind: input, shape index: {}]
  %s4 = inlined_call_operand.vmem [shape: f32[8,72], index: 4, kind: input, shape index: {}]
  %s5 = inlined_call_operand.vmem [shape: f32[8,1], index: 5, kind: input, shape index: {}]
  %s6 = inlined_call_operand.hbm [shape: f32[2,8,512], index: 6, kind: output, shape index: {}]
  %s7 = sld [smem:[#allocation0]]
  $region65: #{tpu_custom_call.1} parent=0
    _
  %s9 = ssub.s32 1, %s7
  %s10 = scalar_select 0, %s9, %s7
  $region1: #{tpu_custom_call.1} parent=0
    #allocation4 [shape = 'u8[32768]{0}', space=vmem, size = 0x8000, scoped, tag = 'input window, operand 0']
    #allocation5 [shape = 's32[2]{0}', space=sflag, size = 0x8, scoped, tag = 'scoped memory for tpu_custom_call.1']
    #allocation6 [shape = 's32[2]{0}', space=sflag, size = 0x8, scoped, tag = 'scoped memory for tpu_custom_call.1']
    #allocation7 [shape = 'u8[2048]{0}', space=vmem, size = 0x800, scoped, tag = 'input window, operand 1, single buffered']
    #allocation8 [shape = 's32[1]{0}', space=sflag, size = 0x4, scoped, tag = 'scoped memory for tpu_custom_call.1']
    #allocation9 [shape = 'u8[32768]{0}', space=vmem, size = 0x8000, scoped, tag = 'output window, operand 0']
    %11 = vsyncpa [#allocation5], 0
    %s12 = scalar_lea.sflag [#allocation5], 1
    %13 = vsyncpa %s12, 0
    %14 = vsyncpa [#allocation8], 0
    %15 = vsyncpa [#allocation6], 0
    %s16 = scalar_lea.sflag [#allocation6], 1
    %17 = vsyncpa %s16, 0
    loop: start=0, step=1, limit=4
    $region2: #{tpu_custom_call.1} parent=1 // loop_pre_header
      _
    $region3: #{tpu_custom_call.1} parent=1 // loop_header
      %s19 = sphi 0, %s23
      %p20 = scmp.ge.s32.totalorder %s19, 4
      %s29 = sphi 0, %s31
      %s32 = sphi 0, %s29
      %s33 = sphi 0, %s32
      %s49 = sphi 0, %s33
      %s53 = sphi 0, %s53
      %s55 = sphi 0, %s53
      %s56 = sphi 0, %s55
      %s70 = sphi 0, %s56
      %s74 = sphi 0, %s74
      %s76 = sphi 0, %s74
      %s77 = sphi 0, %s76
      %s91 = sphi 0, %s77
      %s95 = sphi 0, %s95
      %s97 = sphi 0, %s95
      %s98 = sphi 0, %s97
      %s112 = sphi 0, %s98
      %s116 = sphi 0, %s116
      %s118 = sphi 0, %s116
      %s119 = sphi 0, %s118
      %s133 = sphi 0, %s119
      %s137 = sphi 0, %s137
      %s139 = sphi 0, %s137
      %s140 = sphi 0, %s139
      %s154 = sphi 0, %s140
      %s160 = sphi 0, %s162
      %s163 = sphi 0, %s160
      %s164 = sphi 0, %s163
      %s180 = sphi 0, %s164
    $region4: #{tpu_custom_call.1} parent=1 // loop_header_branch
      %22 = sbr.rel (%p20) target = $region8
    $region5: #{tpu_custom_call.1} parent=1 // loop_body
      %s24 = ssub.s32 %s19, 1
      %s25 = ssub.s32 %s19, 2
      %s26 = sadd.s32 %s19, 1
      %s27 = ssub.s32 %s19, %s26
      %p28 = scmp.eq.s32.totalorder %s27, 0
      %s30 = sadd.s32 %s29, 1
      %s31 = scalar_select %p28, %s29, %s30
      %p34 = pneg %p28
      %p35 = scmp.eq.s32.totalorder %s19, 1
      %p36 = por %p34, %p35
      %p37 = scmp.ne.s32.totalorder %s29, %s32
      %p38 = scmp.eq.s32.totalorder %s19, 0
      %p39 = por %p37, %p38
      %p40 = scmp.ne.s32.totalorder %s29, %s32
      %p41 = scmp.eq.s32.totalorder %s24, 1
      %p42 = por %p40, %p41
      %p43 = scmp.ne.s32.totalorder %s32, %s33
      %p44 = scmp.eq.s32.totalorder %s24, 0
      %p45 = por %p43, %p44
      %p46 = scmp.ne.s32.totalorder %s32, %s33
      %p47 = scmp.eq.s32.totalorder %s25, 1
      %p48 = por %p46, %p47
      %p50 = scmp.ne.s32.totalorder %s33, %s49
      %p51 = scmp.eq.s32.totalorder %s25, 0
      %p52 = por %p50, %p51
      %s54 = sadd.s32 %s53, 1
      %p57 = scmp.eq.s32.totalorder %s19, 1
      %p58 = scmp.ne.s32.totalorder %s53, %s55
      %p59 = scmp.eq.s32.totalorder %s19, 0
      %p60 = por %p58, %p59
      %p61 = scmp.ne.s32.totalorder %s53, %s55
      %p62 = scmp.eq.s32.totalorder %s24, 1
      %p63 = por %p61, %p62
      %p64 = scmp.ne.s32.totalorder %s55, %s56
      %p65 = scmp.eq.s32.totalorder %s24, 0
      %p66 = por %p64, %p65
      %p67 = scmp.ne.s32.totalorder %s55, %s56
      %p68 = scmp.eq.s32.totalorder %s25, 1
      %p69 = por %p67, %p68
      %p71 = scmp.ne.s32.totalorder %s56, %s70
      %p72 = scmp.eq.s32.totalorder %s25, 0
      %p73 = por %p71, %p72
      %s75 = sadd.s32 %s74, 1
      %p78 = scmp.eq.s32.totalorder %s19, 1
      %p79 = scmp.ne.s32.totalorder %s74, %s76
      %p80 = scmp.eq.s32.totalorder %s19, 0
      %p81 = por %p79, %p80
      %p82 = scmp.ne.s32.totalorder %s74, %s76
      %p83 = scmp.eq.s32.totalorder %s24, 1
      %p84 = por %p82, %p83
      %p85 = scmp.ne.s32.totalorder %s76, %s77
      %p86 = scmp.eq.s32.totalorder %s24, 0
      %p87 = por %p85, %p86
      %p88 = scmp.ne.s32.totalorder %s76, %s77
      %p89 = scmp.eq.s32.totalorder %s25, 1
      %p90 = por %p88, %p89
      %p92 = scmp.ne.s32.totalorder %s77, %s91
      %p93 = scmp.eq.s32.totalorder %s25, 0
      %p94 = por %p92, %p93
      %s96 = sadd.s32 %s95, 1
      %p99 = scmp.eq.s32.totalorder %s19, 1
      %p100 = scmp.ne.s32.totalorder %s95, %s97
      %p101 = scmp.eq.s32.totalorder %s19, 0
      %p102 = por %p100, %p101
      %p103 = scmp.ne.s32.totalorder %s95, %s97
      %p104 = scmp.eq.s32.totalorder %s24, 1
      %p105 = por %p103, %p104
      %p106 = scmp.ne.s32.totalorder %s97, %s98
      %p107 = scmp.eq.s32.totalorder %s24, 0
      %p108 = por %p106, %p107
      %p109 = scmp.ne.s32.totalorder %s97, %s98
      %p110 = scmp.eq.s32.totalorder %s25, 1
      %p111 = por %p109, %p110
      %p113 = scmp.ne.s32.totalorder %s98, %s112
      %p114 = scmp.eq.s32.totalorder %s25, 0
      %p115 = por %p113, %p114
      %s117 = sadd.s32 %s116, 1
      %p120 = scmp.eq.s32.totalorder %s19, 1
      %p121 = scmp.ne.s32.totalorder %s116, %s118
      %p122 = scmp.eq.s32.totalorder %s19, 0
      %p123 = por %p121, %p122
      %p124 = scmp.ne.s32.totalorder %s116, %s118
      %p125 = scmp.eq.s32.totalorder %s24, 1
      %p126 = por %p124, %p125
      %p127 = scmp.ne.s32.totalorder %s118, %s119
      %p128 = scmp.eq.s32.totalorder %s24, 0
      %p129 = por %p127, %p128
      %p130 = scmp.ne.s32.totalorder %s118, %s119
      %p131 = scmp.eq.s32.totalorder %s25, 1
      %p132 = por %p130, %p131
      %p134 = scmp.ne.s32.totalorder %s119, %s133
      %p135 = scmp.eq.s32.totalorder %s25, 0
      %p136 = por %p134, %p135
      %s138 = sadd.s32 %s137, 1
      %p141 = scmp.eq.s32.totalorder %s19, 1
      %p142 = scmp.ne.s32.totalorder %s137, %s139
      %p143 = scmp.eq.s32.totalorder %s19, 0
      %p144 = por %p142, %p143
      %p145 = scmp.ne.s32.totalorder %s137, %s139
      %p146 = scmp.eq.s32.totalorder %s24, 1
      %p147 = por %p145, %p146
      %p148 = scmp.ne.s32.totalorder %s139, %s140
      %p149 = scmp.eq.s32.totalorder %s24, 0
      %p150 = por %p148, %p149
      %p151 = scmp.ne.s32.totalorder %s139, %s140
      %p152 = scmp.eq.s32.totalorder %s25, 1
      %p153 = por %p151, %p152
      %p155 = scmp.ne.s32.totalorder %s140, %s154
      %p156 = scmp.eq.s32.totalorder %s25, 0
      %p157 = por %p155, %p156
      %s158 = ssub.s32 %s19, %s26
      %p159 = scmp.eq.s32.totalorder %s158, 0
      %s161 = sadd.s32 %s160, 1
      %s162 = scalar_select %p159, %s160, %s161
      %p165 = pneg %p159
      %p166 = scmp.eq.s32.totalorder %s19, 1
      %p167 = por %p165, %p166
      %p168 = scmp.ne.s32.totalorder %s160, %s163
      %p169 = scmp.eq.s32.totalorder %s19, 0
      %p170 = por %p168, %p169
      %p171 = scmp.ne.s32.totalorder %s160, %s163
      %p172 = scmp.eq.s32.totalorder %s24, 1
      %p173 = por %p171, %p172
      %p174 = scmp.ne.s32.totalorder %s163, %s164
      %p175 = scmp.eq.s32.totalorder %s24, 0
      %p176 = por %p174, %p175
      %p177 = scmp.ne.s32.totalorder %s163, %s164
      %p178 = scmp.eq.s32.totalorder %s25, 1
      %p179 = por %p177, %p178
      %p181 = scmp.ne.s32.totalorder %s164, %s180
      %p182 = scmp.eq.s32.totalorder %s25, 0
      %p183 = por %p181, %p182
      %p184 = scmp.le.s32.totalorder 1, %s19
      %p185 = scmp.lt.s32.totalorder %s19, 3
      %p186 = pnand %p184, %p185
      %p187 = pneg %p186
      // Predicated region
      $region9: #{tpu_custom_call.1} parent=5 // pred_check
        _
      $region10: #{tpu_custom_call.1} parent=5 // pred_check_branch
        %189 = sbr.rel (%p186) target = $region12
      $region11: #{tpu_custom_call.1} parent=5 // pred_region
        %s190 = ssub.s32 %s19, 1
        // Predicated region
        $region13: #{tpu_custom_call.1} parent=11 // pred_check
          %p191 = pneg %p66
        $region14: #{tpu_custom_call.1} parent=11 // pred_check_branch
          %193 = sbr.rel (%p191) target = $region16
        $region15: #{tpu_custom_call.1} parent=11 // pred_region
          %s195 = ssub.s32 64, 64
          %196 = vsyncadd [#allocation8], %s195
          %s198 = sshll.u32 [#allocation7], 4
          %s199 = int_to_ptr.vmem [resolvable:$true] %s198
          %201 = dma.hbm_to_vmem [thread:$0]  %s1, 64, %s199, [#allocation8]
        $region16: #{tpu_custom_call.1} parent=11 // pred_fallthru
          _
        // Predicated region
        $region17: #{tpu_custom_call.1} parent=11 // pred_check
          %p202 = pneg %p87
        $region18: #{tpu_custom_call.1} parent=11 // pred_check_branch
          %204 = sbr.rel (%p202) target = $region20
        $region19: #{tpu_custom_call.1} parent=11 // pred_region
          _
        $region20: #{tpu_custom_call.1} parent=11 // pred_fallthru
          _
        // Predicated region
        $region21: #{tpu_custom_call.1} parent=11 // pred_check
          %p205 = pneg %p108
        $region22: #{tpu_custom_call.1} parent=11 // pred_check_branch
          %207 = sbr.rel (%p205) target = $region24
        $region23: #{tpu_custom_call.1} parent=11 // pred_region
          _
        $region24: #{tpu_custom_call.1} parent=11 // pred_fallthru
          _
        // Predicated region
        $region25: #{tpu_custom_call.1} parent=11 // pred_check
          %p208 = pneg %p129
        $region26: #{tpu_custom_call.1} parent=11 // pred_check_branch
          %210 = sbr.rel (%p208) target = $region28
        $region27: #{tpu_custom_call.1} parent=11 // pred_region
          _
        $region28: #{tpu_custom_call.1} parent=11 // pred_fallthru
          _
        // Predicated region
        $region29: #{tpu_custom_call.1} parent=11 // pred_check
          %p211 = pneg %p150
        $region30: #{tpu_custom_call.1} parent=11 // pred_check_branch
          %213 = sbr.rel (%p211) target = $region32
        $region31: #{tpu_custom_call.1} parent=11 // pred_region
          _
        $region32: #{tpu_custom_call.1} parent=11 // pred_fallthru
          _
      $region12: #{tpu_custom_call.1} parent=5 // pred_fallthru
        _
      %p214 = scmp.lt.s32.totalorder %s19, 2
      // Predicated region
      $region33: #{tpu_custom_call.1} parent=5 // pred_check
        %p215 = pneg %p214
      $region34: #{tpu_custom_call.1} parent=5 // pred_check_branch
        %217 = sbr.rel (%p215) target = $region36
      $region35: #{tpu_custom_call.1} parent=5 // pred_region
        // Predicated region
        $region37: #{tpu_custom_call.1} parent=35 // pred_check
          %p218 = pneg %p39
        $region38: #{tpu_custom_call.1} parent=35 // pred_check_branch
          %220 = sbr.rel (%p218) target = $region40
        $region39: #{tpu_custom_call.1} parent=35 // pred_region
          %s221 = sand.u32 %s29, 1
          %s222 = scalar_lea.sflag [#allocation5], %s221
          %s223 = sand.u32 %s29, 1
          %s224 = smul.addr %s223, 32
          %s225 = scalar_lea.vmem [#allocation4], %s224
          %s227 = ssub.s32 512, 512
          %228 = vsyncadd %s222, %s227
          %s229 = smul.addr %s19, 4
          %s230 = smul.addr %s229, 128
          %s231 = scalar_lea.hbm %s0, %s230
          %s233 = sshll.u32 %s225, 4
          %s234 = int_to_ptr.vmem [resolvable:$true] %s233
          %236 = dma.hbm_to_vmem [thread:$0]  %s231, 512, %s234, %s222
        $region40: #{tpu_custom_call.1} parent=35 // pred_fallthru
          _
      $region36: #{tpu_custom_call.1} parent=5 // pred_fallthru
        _
      %p237 = scmp.le.s32.totalorder 1, %s19
      %p238 = scmp.lt.s32.totalorder %s19, 3
      %p239 = pnand %p237, %p238
      %p240 = pneg %p239
      // Predicated region
      $region41: #{tpu_custom_call.1} parent=5 // pred_check
        _
      $region42: #{tpu_custom_call.1} parent=5 // pred_check_branch
        %242 = sbr.rel (%p239) target = $region44
      $region43: #{tpu_custom_call.1} parent=5 // pred_region
        %s243 = ssub.s32 %s19, 1
        %s244 = sand.u32 %s32, 1
        %s245 = scalar_lea.sflag [#allocation5], %s244
        %s246 = sand.u32 %s32, 1
        %s247 = smul.addr %s246, 32
        %s248 = scalar_lea.vmem [#allocation4], %s247
        // Predicated region
        $region45: #{tpu_custom_call.1} parent=43 // pred_check
          %p249 = pneg %p45
        $region46: #{tpu_custom_call.1} parent=43 // pred_check_branch
          %251 = sbr.rel (%p249) target = $region48
        $region47: #{tpu_custom_call.1} parent=43 // pred_region
          %252 = dma.done %s245, 512
        $region48: #{tpu_custom_call.1} parent=43 // pred_fallthru
          _
        // Predicated region
        $region49: #{tpu_custom_call.1} parent=43 // pred_check
          %p253 = pneg %p66
        $region50: #{tpu_custom_call.1} parent=43 // pred_check_branch
          %255 = sbr.rel (%p253) target = $region52
        $region51: #{tpu_custom_call.1} parent=43 // pred_region
          %256 = dma.done [#allocation8], 64
        $region52: #{tpu_custom_call.1} parent=43 // pred_fallthru
          _
        %s257 = sand.u32 %s32, 1
        %s258 = scalar_lea.sflag [#allocation5], %s257
        %s259 = sand.u32 %s32, 1
        %s260 = smul.addr %s259, 32
        %s261 = scalar_lea.vmem [#allocation4], %s260
        %p262 = pneg %p45
        %p263 = pneg %p42
        %p264 = pneg %p66
        %p265 = pneg %p63
        %p266 = pneg %p87
        %p267 = pneg %p84
        %p268 = pneg %p108
        %p269 = pneg %p105
        %p270 = pneg %p129
        %p271 = pneg %p126
        %p272 = pneg %p150
        %p273 = pneg %p147
        %p274 = pneg %p176
        %p275 = pneg %p173
        %s276 = sand.u32 %s163, 1
        %s277 = scalar_lea.sflag [#allocation6], %s276
        %s278 = sand.u32 %s163, 1
        %s279 = smul.addr %s278, 32
        %s280 = scalar_lea.vmem [#allocation9], %s279
        %v281 = vld [vmem:[%s248] sm:$0xff]
        %v282 = vld [vmem:[%s248 + $0x8] sm:$0xff]
        %v283 = vld [vmem:[%s248 + $0x10] sm:$0xff]
        %v284 = vld [vmem:[%s248 + $0x18] sm:$0xff]
        %290 = vrot.lane.b32.xlu0 0.0, 21
        %v291 = vpop.permute.xlu0 %290
        %292 = vrot.lane.b32.xlu0 %v281, 21
        %v293 = vpop.permute.xlu0 %292
        %294 = vrot.lane.b32.xlu0 %v282, 21
        %v295 = vpop.permute.xlu0 %294
        %296 = vrot.lane.b32.xlu0 %v283, 21
        %v297 = vpop.permute.xlu0 %296
        %298 = vrot.lane.b32.xlu0 %v284, 21
        %v299 = vpop.permute.xlu0 %298
        %vm300 = vcmask 171008
        %v301 = vsel %vm300, %v291, %v293
        %v302 = vsel %vm300, %v293, %v295
        %v303 = vsel %vm300, %v295, %v297
        %v304 = vsel %vm300, %v297, %v299
        %309 = vst [vmem:[#allocation2] sm:$0xff] %v301
        %310 = vst [vmem:[#allocation2 + $0x8] sm:$0xff] %v302
        %311 = vst [vmem:[#allocation2 + $0x10] sm:$0xff] %v303
        %312 = vst [vmem:[#allocation2 + $0x18] sm:$0xff] %v304
        %313 = vrot.lane.b32.xlu0 0.0, 20
        %v314 = vpop.permute.xlu0 %313
        %315 = vrot.lane.b32.xlu0 %v281, 20
        %v316 = vpop.permute.xlu0 %315
        %317 = vrot.lane.b32.xlu0 %v282, 20
        %v318 = vpop.permute.xlu0 %317
        %319 = vrot.lane.b32.xlu0 %v283, 20
        %v320 = vpop.permute.xlu0 %319
        %321 = vrot.lane.b32.xlu0 %v284, 20
        %v322 = vpop.permute.xlu0 %321
        %vm323 = vcmask 162816
        %v324 = vsel %vm323, %v314, %v316
        %v325 = vsel %vm323, %v316, %v318
        %v326 = vsel %vm323, %v318, %v320
        %v327 = vsel %vm323, %v320, %v322
        %332 = vst [vmem:[#allocation2 + $0x20] sm:$0xff] %v324
        %333 = vst [vmem:[#allocation2 + $0x28] sm:$0xff] %v325
        %334 = vst [vmem:[#allocation2 + $0x30] sm:$0xff] %v326
        %335 = vst [vmem:[#allocation2 + $0x38] sm:$0xff] %v327
        %336 = vrot.lane.b32.xlu0 0.0, 19
        %v337 = vpop.permute.xlu0 %336
        %338 = vrot.lane.b32.xlu0 %v281, 19
        %v339 = vpop.permute.xlu0 %338
        %340 = vrot.lane.b32.xlu0 %v282, 19
        %v341 = vpop.permute.xlu0 %340
        %342 = vrot.lane.b32.xlu0 %v283, 19
        %v343 = vpop.permute.xlu0 %342
        %344 = vrot.lane.b32.xlu0 %v284, 19
        %v345 = vpop.permute.xlu0 %344
        %vm346 = vcmask 154624
        %v347 = vsel %vm346, %v337, %v339
        %v348 = vsel %vm346, %v339, %v341
        %v349 = vsel %vm346, %v341, %v343
        %v350 = vsel %vm346, %v343, %v345
        %355 = vst [vmem:[#allocation2 + $0x40] sm:$0xff] %v347
        %356 = vst [vmem:[#allocation2 + $0x48] sm:$0xff] %v348
        %357 = vst [vmem:[#allocation2 + $0x50] sm:$0xff] %v349
        %358 = vst [vmem:[#allocation2 + $0x58] sm:$0xff] %v350
        %359 = vrot.lane.b32.xlu0 0.0, 1
        %v360 = vpop.permute.xlu0 %359
        %361 = vrot.lane.b32.xlu0 %v281, 1
        %v362 = vpop.permute.xlu0 %361
        %363 = vrot.lane.b32.xlu0 %v282, 1
        %v364 = vpop.permute.xlu0 %363
        %365 = vrot.lane.b32.xlu0 %v283, 1
        %v366 = vpop.permute.xlu0 %365
        %367 = vrot.lane.b32.xlu0 %v284, 1
        %v368 = vpop.permute.xlu0 %367
        %vm369 = vcmask 7168
        %v370 = vsel %vm369, %v360, %v362
        %v371 = vsel %vm369, %v362, %v364
        %v372 = vsel %vm369, %v364, %v366
        %v373 = vsel %vm369, %v366, %v368
        %378 = vst [vmem:[#allocation2 + $0x60] sm:$0xff] %v370
        %379 = vst [vmem:[#allocation2 + $0x68] sm:$0xff] %v371
        %380 = vst [vmem:[#allocation2 + $0x70] sm:$0xff] %v372
        %381 = vst [vmem:[#allocation2 + $0x78] sm:$0xff] %v373
        %382 = vst [vmem:[#allocation2 + $0x80] sm:$0xff] %v281
        %383 = vst [vmem:[#allocation2 + $0x88] sm:$0xff] %v282
        %384 = vst [vmem:[#allocation2 + $0x90] sm:$0xff] %v283
        %385 = vst [vmem:[#allocation2 + $0x98] sm:$0xff] %v284
        %386 = vrot.lane.b32.xlu0 %v281, 127
        %v387 = vpop.permute.xlu0 %386
        %388 = vrot.lane.b32.xlu0 %v282, 127
        %v389 = vpop.permute.xlu0 %388
        %390 = vrot.lane.b32.xlu0 %v283, 127
        %v391 = vpop.permute.xlu0 %390
        %392 = vrot.lane.b32.xlu0 %v284, 127
        %v393 = vpop.permute.xlu0 %392
        %394 = vrot.lane.b32.xlu0 0.0, 127
        %v395 = vpop.permute.xlu0 %394
        %vm396 = vcmask 1039360
        %v397 = vsel %vm396, %v387, %v389
        %v398 = vsel %vm396, %v389, %v391
        %v399 = vsel %vm396, %v391, %v393
        %v400 = vsel %vm396, %v393, %v395
        %405 = vst [vmem:[#allocation2 + $0xa0] sm:$0xff] %v397
        %406 = vst [vmem:[#allocation2 + $0xa8] sm:$0xff] %v398
        %407 = vst [vmem:[#allocation2 + $0xb0] sm:$0xff] %v399
        %408 = vst [vmem:[#allocation2 + $0xb8] sm:$0xff] %v400
        %409 = vrot.lane.b32.xlu0 %v281, 109
        %v410 = vpop.permute.xlu0 %409
        %411 = vrot.lane.b32.xlu0 %v282, 109
        %v412 = vpop.permute.xlu0 %411
        %413 = vrot.lane.b32.xlu0 %v283, 109
        %v414 = vpop.permute.xlu0 %413
        %415 = vrot.lane.b32.xlu0 %v284, 109
        %v416 = vpop.permute.xlu0 %415
        %417 = vrot.lane.b32.xlu0 0.0, 109
        %v418 = vpop.permute.xlu0 %417
        %vm419 = vcmask 891904
        %v420 = vsel %vm419, %v410, %v412
        %v421 = vsel %vm419, %v412, %v414
        %v422 = vsel %vm419, %v414, %v416
        %v423 = vsel %vm419, %v416, %v418
        %428 = vst [vmem:[#allocation2 + $0xc0] sm:$0xff] %v420
        %429 = vst [vmem:[#allocation2 + $0xc8] sm:$0xff] %v421
        %430 = vst [vmem:[#allocation2 + $0xd0] sm:$0xff] %v422
        %431 = vst [vmem:[#allocation2 + $0xd8] sm:$0xff] %v423
        %432 = vrot.lane.b32.xlu0 %v281, 108
        %v433 = vpop.permute.xlu0 %432
        %434 = vrot.lane.b32.xlu0 %v282, 108
        %v435 = vpop.permute.xlu0 %434
        %436 = vrot.lane.b32.xlu0 %v283, 108
        %v437 = vpop.permute.xlu0 %436
        %438 = vrot.lane.b32.xlu0 %v284, 108
        %v439 = vpop.permute.xlu0 %438
        %440 = vrot.lane.b32.xlu0 0.0, 108
        %v441 = vpop.permute.xlu0 %440
        %vm442 = vcmask 883712
        %v443 = vsel %vm442, %v433, %v435
        %v444 = vsel %vm442, %v435, %v437
        %v445 = vsel %vm442, %v437, %v439
        %v446 = vsel %vm442, %v439, %v441
        %451 = vst [vmem:[#allocation2 + $0xe0] sm:$0xff] %v443
        %452 = vst [vmem:[#allocation2 + $0xe8] sm:$0xff] %v444
        %453 = vst [vmem:[#allocation2 + $0xf0] sm:$0xff] %v445
        %454 = vst [vmem:[#allocation2 + $0xf8] sm:$0xff] %v446
        %455 = vrot.lane.b32.xlu0 %v281, 107
        %v456 = vpop.permute.xlu0 %455
        %457 = vrot.lane.b32.xlu0 %v282, 107
        %v458 = vpop.permute.xlu0 %457
        %459 = vrot.lane.b32.xlu0 %v283, 107
        %v460 = vpop.permute.xlu0 %459
        %461 = vrot.lane.b32.xlu0 %v284, 107
        %v462 = vpop.permute.xlu0 %461
        %463 = vrot.lane.b32.xlu0 0.0, 107
        %v464 = vpop.permute.xlu0 %463
        %vm465 = vcmask 875520
        %v466 = vsel %vm465, %v456, %v458
        %v467 = vsel %vm465, %v458, %v460
        %v468 = vsel %vm465, %v460, %v462
        %v469 = vsel %vm465, %v462, %v464
        %474 = vst [vmem:[#allocation2 + $0x100] sm:$0xff] %v466
        %475 = vst [vmem:[#allocation2 + $0x108] sm:$0xff] %v467
        %476 = vst [vmem:[#allocation2 + $0x110] sm:$0xff] %v468
        %477 = vst [vmem:[#allocation2 + $0x118] sm:$0xff] %v469
        %v478 = vld [vmem:[%s2] sm:$0xff]
        %v479 = vld [vmem:[#allocation2] sm:$0xff]
        %v480 = vld [vmem:[#allocation2 + $0x8] sm:$0xff]
        %v481 = vld [vmem:[#allocation2 + $0x10] sm:$0xff]
        %v482 = vld [vmem:[#allocation2 + $0x18] sm:$0xff]
        %v483 = vld [vmem:[#allocation2 + $0x20] sm:$0xff]
        %v484 = vld [vmem:[#allocation2 + $0x28] sm:$0xff]
        %v485 = vld [vmem:[#allocation2 + $0x30] sm:$0xff]
        %v486 = vld [vmem:[#allocation2 + $0x38] sm:$0xff]
        %v487 = vld [vmem:[#allocation2 + $0x40] sm:$0xff]
        %v488 = vld [vmem:[#allocation2 + $0x48] sm:$0xff]
        %v489 = vld [vmem:[#allocation2 + $0x50] sm:$0xff]
        %v490 = vld [vmem:[#allocation2 + $0x58] sm:$0xff]
        %v491 = vld [vmem:[#allocation2 + $0x60] sm:$0xff]
        %v492 = vld [vmem:[#allocation2 + $0x68] sm:$0xff]
        %v493 = vld [vmem:[#allocation2 + $0x70] sm:$0xff]
        %v494 = vld [vmem:[#allocation2 + $0x78] sm:$0xff]
        %v495 = vld [vmem:[#allocation2 + $0x80] sm:$0xff]
        %v496 = vld [vmem:[#allocation2 + $0x88] sm:$0xff]
        %v497 = vld [vmem:[#allocation2 + $0x90] sm:$0xff]
        %v498 = vld [vmem:[#allocation2 + $0x98] sm:$0xff]
        %v499 = vld [vmem:[#allocation2 + $0xa0] sm:$0xff]
        %v500 = vld [vmem:[#allocation2 + $0xa8] sm:$0xff]
        %v501 = vld [vmem:[#allocation2 + $0xb0] sm:$0xff]
        %v502 = vld [vmem:[#allocation2 + $0xb8] sm:$0xff]
        %v503 = vld [vmem:[#allocation2 + $0xc0] sm:$0xff]
        %v504 = vld [vmem:[#allocation2 + $0xc8] sm:$0xff]
        %v505 = vld [vmem:[#allocation2 + $0xd0] sm:$0xff]
        %v506 = vld [vmem:[#allocation2 + $0xd8] sm:$0xff]
        %v507 = vld [vmem:[#allocation2 + $0xe0] sm:$0xff]
        %v508 = vld [vmem:[#allocation2 + $0xe8] sm:$0xff]
        %v509 = vld [vmem:[#allocation2 + $0xf0] sm:$0xff]
        %v510 = vld [vmem:[#allocation2 + $0xf8] sm:$0xff]
        %v511 = vld [vmem:[#allocation2 + $0x100] sm:$0xff]
        %v512 = vld [vmem:[#allocation2 + $0x108] sm:$0xff]
        %v513 = vld [vmem:[#allocation2 + $0x110] sm:$0xff]
        %v514 = vld [vmem:[#allocation2 + $0x118] sm:$0xff]
        %vm515 = vcmask 588800
        %v517 = vsel %vm515, %v478, 0
        %519 = vmatprep.subr.mxu0 0.0
        %520 = vmatpush1.msra.mxu0 0.0
        %521 = vmatprep.subr.mxu0 0.0
        %522 = vmatpush1.msra.mxu0 0.0
        %523 = vmatprep.subr.mxu0 0.0
        %524 = vmatpush1.msra.mxu0 0.0
        %525 = vmatprep.subr.mxu0 0.0
        %526 = vmatpush1.msra.mxu0 0.0
        %527 = vmatprep.subr.mxu0 0.0
        %528 = vmatpush1.msra.mxu0 0.0
        %529 = vmatprep.subr.mxu0 0.0
        %530 = vmatpush1.msra.mxu0 0.0
        %531 = vmatprep.subr.mxu0 0.0
        %532 = vmatpush1.msra.mxu0 0.0
        %533 = vmatprep.subr.mxu0 %v512
        %534 = vmatpush1.msra.mxu0 %v511
        %535 = vmatprep.subr.mxu0 %v508
        %536 = vmatpush1.msra.mxu0 %v507
        %537 = vmatprep.subr.mxu0 %v504
        %538 = vmatpush1.msra.mxu0 %v503
        %539 = vmatprep.subr.mxu0 %v500
        %540 = vmatpush1.msra.mxu0 %v499
        %541 = vmatprep.subr.mxu0 %v496
        %542 = vmatpush1.msra.mxu0 %v495
        %543 = vmatprep.subr.mxu0 %v492
        %544 = vmatpush1.msra.mxu0 %v491
        %545 = vmatprep.subr.mxu0 %v488
        %546 = vmatpush1.msra.mxu0 %v487
        %547 = vmatprep.subr.mxu0 %v484
        %548 = vmatpush1.msra.mxu0 %v483
        %549 = vmatprep.subr.mxu0 %v480
        %550 = vmatpush1.msra.mxu0 %v479
        %551 = vmatprep.subr.mxu0 0.0
        %552 = vmatpush2.msra.mxu0 0.0
        %553 = vmatprep.subr.mxu0 0.0
        %554 = vmatpush2.msra.mxu0 0.0
        %555 = vmatprep.subr.mxu0 0.0
        %556 = vmatpush2.msra.mxu0 0.0
        %557 = vmatprep.subr.mxu0 0.0
        %558 = vmatpush2.msra.mxu0 0.0
        %559 = vmatprep.subr.mxu0 0.0
        %560 = vmatpush2.msra.mxu0 0.0
        %561 = vmatprep.subr.mxu0 0.0
        %562 = vmatpush2.msra.mxu0 0.0
        %563 = vmatprep.subr.mxu0 0.0
        %564 = vmatpush2.msra.mxu0 0.0
        %565 = vmatprep.subr.mxu0 0.0
        %566 = vmatpush2.msra.mxu0 0.0
        %567 = vmatprep.subr.mxu0 0.0
        %568 = vmatpush2.msra.mxu0 0.0
        %569 = vmatprep.subr.mxu0 0.0
        %570 = vmatpush2.msra.mxu0 0.0
        %571 = vmatprep.subr.mxu0 0.0
        %572 = vmatpush2.msra.mxu0 0.0
        %573 = vmatprep.subr.mxu0 0.0
        %574 = vmatpush2.msra.mxu0 0.0
        %575 = vmatprep.subr.mxu0 0.0
        %576 = vmatpush2.msra.mxu0 0.0
        %577 = vmatprep.subr.mxu0 0.0
        %578 = vmatpush2.msra.mxu0 0.0
        %579 = vmatprep.subr.mxu0 0.0
        %580 = vmatpush2.msra.mxu0 0.0
        %581 = vmatprep.subr.mxu0 0.0
        %582 = vmatpush2.msra.mxu0 0.0
        %583 = vmatprep.mubr.f32.mxu0 0.0
        %584 = vmatmul.mubr.f32.gmra.mxu0 %v517
        %v585 = vpop.f32.mrf.mxu0
        %v586 = vadd.f32 0.0, %v585
        %v587 = vpop.f32.mrf.mxu0
        %v588 = vadd.f32 0.0, %v587
        %589 = vdwg.mxu0
        %590 = vmatprep.subr.mxu0 0.0
        %591 = vmatpush1.msra.mxu0 0.0
        %592 = vmatprep.subr.mxu0 0.0
        %593 = vmatpush1.msra.mxu0 0.0
        %594 = vmatprep.subr.mxu0 0.0
        %595 = vmatpush1.msra.mxu0 0.0
        %596 = vmatprep.subr.mxu0 0.0
        %597 = vmatpush1.msra.mxu0 0.0
        %598 = vmatprep.subr.mxu0 0.0
        %599 = vmatpush1.msra.mxu0 0.0
        %600 = vmatprep.subr.mxu0 0.0
        %601 = vmatpush1.msra.mxu0 0.0
        %602 = vmatprep.subr.mxu0 0.0
        %603 = vmatpush1.msra.mxu0 0.0
        %604 = vmatprep.subr.mxu0 %v514
        %605 = vmatpush1.msra.mxu0 %v513
        %606 = vmatprep.subr.mxu0 %v510
        %607 = vmatpush1.msra.mxu0 %v509
        %608 = vmatprep.subr.mxu0 %v506
        %609 = vmatpush1.msra.mxu0 %v505
        %610 = vmatprep.subr.mxu0 %v502
        %611 = vmatpush1.msra.mxu0 %v501
        %612 = vmatprep.subr.mxu0 %v498
        %613 = vmatpush1.msra.mxu0 %v497
        %614 = vmatprep.subr.mxu0 %v494
        %615 = vmatpush1.msra.mxu0 %v493
        %616 = vmatprep.subr.mxu0 %v490
        %617 = vmatpush1.msra.mxu0 %v489
        %618 = vmatprep.subr.mxu0 %v486
        %619 = vmatpush1.msra.mxu0 %v485
        %620 = vmatprep.subr.mxu0 %v482
        %621 = vmatpush1.msra.mxu0 %v481
        %622 = vmatprep.subr.mxu0 0.0
        %623 = vmatpush2.msra.mxu0 0.0
        %624 = vmatprep.subr.mxu0 0.0
        %625 = vmatpush2.msra.mxu0 0.0
        %626 = vmatprep.subr.mxu0 0.0
        %627 = vmatpush2.msra.mxu0 0.0
        %628 = vmatprep.subr.mxu0 0.0
        %629 = vmatpush2.msra.mxu0 0.0
        %630 = vmatprep.subr.mxu0 0.0
        %631 = vmatpush2.msra.mxu0 0.0
        %632 = vmatprep.subr.mxu0 0.0
        %633 = vmatpush2.msra.mxu0 0.0
        %634 = vmatprep.subr.mxu0 0.0
        %635 = vmatpush2.msra.mxu0 0.0
        %636 = vmatprep.subr.mxu0 0.0
        %637 = vmatpush2.msra.mxu0 0.0
        %638 = vmatprep.subr.mxu0 0.0
        %639 = vmatpush2.msra.mxu0 0.0
        %640 = vmatprep.subr.mxu0 0.0
        %641 = vmatpush2.msra.mxu0 0.0
        %642 = vmatprep.subr.mxu0 0.0
        %643 = vmatpush2.msra.mxu0 0.0
        %644 = vmatprep.subr.mxu0 0.0
        %645 = vmatpush2.msra.mxu0 0.0
        %646 = vmatprep.subr.mxu0 0.0
        %647 = vmatpush2.msra.mxu0 0.0
        %648 = vmatprep.subr.mxu0 0.0
        %649 = vmatpush2.msra.mxu0 0.0
        %650 = vmatprep.subr.mxu0 0.0
        %651 = vmatpush2.msra.mxu0 0.0
        %652 = vmatprep.subr.mxu0 0.0
        %653 = vmatpush2.msra.mxu0 0.0
        %654 = vmatprep.mubr.f32.mxu0 0.0
        %655 = vmatmul.mubr.f32.gmra.mxu0 %v517
        %v656 = vpop.f32.mrf.mxu0
        %v657 = vadd.f32 0.0, %v656
        %v658 = vpop.f32.mrf.mxu0
        %v659 = vadd.f32 0.0, %v658
        %660 = vdwg.mxu0
        %661 = vst [vmem:[#allocation3] sm:$0xff] %v586
        %662 = vst [vmem:[#allocation3 + $0x8] sm:$0xff] %v588
        %663 = vst [vmem:[#allocation3 + $0x10] sm:$0xff] %v657
        %664 = vst [vmem:[#allocation3 + $0x18] sm:$0xff] %v659
        %v665 = vld [vmem:[#allocation3] sm:$0xff]
        %v666 = vld [vmem:[#allocation3 + $0x8] sm:$0xff]
        %v667 = vld [vmem:[#allocation3 + $0x10] sm:$0xff]
        %v668 = vld [vmem:[#allocation3 + $0x18] sm:$0xff]
        %v669 = vld [vmem:[%s3] sm:$0xff]
        %671 = vset.pattern.permute.xlu0 0
        %672 = vperm.xlu0 %671, %v669
        %v673 = vpop.permute.xlu0 %672
        %v675 = vadd.f32 %v665, %v673
        %v676 = vadd.f32 %v666, %v673
        %v677 = vadd.f32 %v667, %v673
        %v678 = vadd.f32 %v668, %v673
        %v679 = vmul.f32 %v675, 0.2
        %v680 = vmul.f32 %v676, 0.2
        %v681 = vmul.f32 %v677, 0.2
        %v682 = vmul.f32 %v678, 0.2
        %v683 = vmax.f32 %v675, %v679
        %v684 = vmax.f32 %v676, %v680
        %v685 = vmax.f32 %v677, %v681
        %v686 = vmax.f32 %v678, %v682
        %v687 = vld [vmem:[#allocation7] sm:$0xf]
        %v689 = vlaneseq
        %v690 = vshrl.u32 %v689, 7
        %v691 = vsub.s32 0, %v690
        %v692 = vrot.slane %v687, %v691
        %v693 = vlaneseq
        %v694 = vshrl.u32 %v693, 7
        %v695 = vsub.s32 1, %v694
        %v696 = vrot.slane %v687, %v695
        %v697 = vlaneseq
        %v698 = vshrl.u32 %v697, 7
        %v699 = vsub.s32 2, %v698
        %v700 = vrot.slane %v687, %v699
        %v701 = vlaneseq
        %v702 = vshrl.u32 %v701, 7
        %v703 = vsub.s32 3, %v702
        %v704 = vrot.slane %v687, %v703
        %v709 = vmul.f32 %v683, %v692
        %v710 = vmul.f32 %v684, %v696
        %v711 = vmul.f32 %v685, %v700
        %v712 = vmul.f32 %v686, %v704
        %717 = vrot.lane.b32.xlu0 %v709, 21
        %v718 = vpop.permute.xlu0 %717
        %719 = vrot.lane.b32.xlu0 %v710, 21
        %v720 = vpop.permute.xlu0 %719
        %721 = vrot.lane.b32.xlu0 %v711, 21
        %v722 = vpop.permute.xlu0 %721
        %723 = vrot.lane.b32.xlu0 %v712, 21
        %v724 = vpop.permute.xlu0 %723
        %v725 = vsel %vm300, %v291, %v718
        %v726 = vsel %vm300, %v718, %v720
        %v727 = vsel %vm300, %v720, %v722
        %v728 = vsel %vm300, %v722, %v724
        %733 = vst [vmem:[#allocation2] sm:$0xff] %v725
        %734 = vst [vmem:[#allocation2 + $0x8] sm:$0xff] %v726
        %735 = vst [vmem:[#allocation2 + $0x10] sm:$0xff] %v727
        %736 = vst [vmem:[#allocation2 + $0x18] sm:$0xff] %v728
        %737 = vrot.lane.b32.xlu0 %v709, 20
        %v738 = vpop.permute.xlu0 %737
        %739 = vrot.lane.b32.xlu0 %v710, 20
        %v740 = vpop.permute.xlu0 %739
        %741 = vrot.lane.b32.xlu0 %v711, 20
        %v742 = vpop.permute.xlu0 %741
        %743 = vrot.lane.b32.xlu0 %v712, 20
        %v744 = vpop.permute.xlu0 %743
        %v745 = vsel %vm323, %v314, %v738
        %v746 = vsel %vm323, %v738, %v740
        %v747 = vsel %vm323, %v740, %v742
        %v748 = vsel %vm323, %v742, %v744
        %753 = vst [vmem:[#allocation2 + $0x20] sm:$0xff] %v745
        %754 = vst [vmem:[#allocation2 + $0x28] sm:$0xff] %v746
        %755 = vst [vmem:[#allocation2 + $0x30] sm:$0xff] %v747
        %756 = vst [vmem:[#allocation2 + $0x38] sm:$0xff] %v748
        %757 = vrot.lane.b32.xlu0 %v709, 19
        %v758 = vpop.permute.xlu0 %757
        %759 = vrot.lane.b32.xlu0 %v710, 19
        %v760 = vpop.permute.xlu0 %759
        %761 = vrot.lane.b32.xlu0 %v711, 19
        %v762 = vpop.permute.xlu0 %761
        %763 = vrot.lane.b32.xlu0 %v712, 19
        %v764 = vpop.permute.xlu0 %763
        %v765 = vsel %vm346, %v337, %v758
        %v766 = vsel %vm346, %v758, %v760
        %v767 = vsel %vm346, %v760, %v762
        %v768 = vsel %vm346, %v762, %v764
        %773 = vst [vmem:[#allocation2 + $0x40] sm:$0xff] %v765
        %774 = vst [vmem:[#allocation2 + $0x48] sm:$0xff] %v766
        %775 = vst [vmem:[#allocation2 + $0x50] sm:$0xff] %v767
        %776 = vst [vmem:[#allocation2 + $0x58] sm:$0xff] %v768
        %777 = vrot.lane.b32.xlu0 %v709, 1
        %v778 = vpop.permute.xlu0 %777
        %779 = vrot.lane.b32.xlu0 %v710, 1
        %v780 = vpop.permute.xlu0 %779
        %781 = vrot.lane.b32.xlu0 %v711, 1
        %v782 = vpop.permute.xlu0 %781
        %783 = vrot.lane.b32.xlu0 %v712, 1
        %v784 = vpop.permute.xlu0 %783
        %v785 = vsel %vm369, %v360, %v778
        %v786 = vsel %vm369, %v778, %v780
        %v787 = vsel %vm369, %v780, %v782
        %v788 = vsel %vm369, %v782, %v784
        %793 = vst [vmem:[#allocation2 + $0x60] sm:$0xff] %v785
        %794 = vst [vmem:[#allocation2 + $0x68] sm:$0xff] %v786
        %795 = vst [vmem:[#allocation2 + $0x70] sm:$0xff] %v787
        %796 = vst [vmem:[#allocation2 + $0x78] sm:$0xff] %v788
        %797 = vst [vmem:[#allocation2 + $0x80] sm:$0xff] %v709
        %798 = vst [vmem:[#allocation2 + $0x88] sm:$0xff] %v710
        %799 = vst [vmem:[#allocation2 + $0x90] sm:$0xff] %v711
        %800 = vst [vmem:[#allocation2 + $0x98] sm:$0xff] %v712
        %801 = vrot.lane.b32.xlu0 %v709, 127
        %v802 = vpop.permute.xlu0 %801
        %803 = vrot.lane.b32.xlu0 %v710, 127
        %v804 = vpop.permute.xlu0 %803
        %805 = vrot.lane.b32.xlu0 %v711, 127
        %v806 = vpop.permute.xlu0 %805
        %807 = vrot.lane.b32.xlu0 %v712, 127
        %v808 = vpop.permute.xlu0 %807
        %v809 = vsel %vm396, %v802, %v804
        %v810 = vsel %vm396, %v804, %v806
        %v811 = vsel %vm396, %v806, %v808
        %v812 = vsel %vm396, %v808, %v395
        %817 = vst [vmem:[#allocation2 + $0xa0] sm:$0xff] %v809
        %818 = vst [vmem:[#allocation2 + $0xa8] sm:$0xff] %v810
        %819 = vst [vmem:[#allocation2 + $0xb0] sm:$0xff] %v811
        %820 = vst [vmem:[#allocation2 + $0xb8] sm:$0xff] %v812
        %821 = vrot.lane.b32.xlu0 %v709, 109
        %v822 = vpop.permute.xlu0 %821
        %823 = vrot.lane.b32.xlu0 %v710, 109
        %v824 = vpop.permute.xlu0 %823
        %825 = vrot.lane.b32.xlu0 %v711, 109
        %v826 = vpop.permute.xlu0 %825
        %827 = vrot.lane.b32.xlu0 %v712, 109
        %v828 = vpop.permute.xlu0 %827
        %v829 = vsel %vm419, %v822, %v824
        %v830 = vsel %vm419, %v824, %v826
        %v831 = vsel %vm419, %v826, %v828
        %v832 = vsel %vm419, %v828, %v418
        %837 = vst [vmem:[#allocation2 + $0xc0] sm:$0xff] %v829
        %838 = vst [vmem:[#allocation2 + $0xc8] sm:$0xff] %v830
        %839 = vst [vmem:[#allocation2 + $0xd0] sm:$0xff] %v831
        %840 = vst [vmem:[#allocation2 + $0xd8] sm:$0xff] %v832
        %841 = vrot.lane.b32.xlu0 %v709, 108
        %v842 = vpop.permute.xlu0 %841
        %843 = vrot.lane.b32.xlu0 %v710, 108
        %v844 = vpop.permute.xlu0 %843
        %845 = vrot.lane.b32.xlu0 %v711, 108
        %v846 = vpop.permute.xlu0 %845
        %847 = vrot.lane.b32.xlu0 %v712, 108
        %v848 = vpop.permute.xlu0 %847
        %v849 = vsel %vm442, %v842, %v844
        %v850 = vsel %vm442, %v844, %v846
        %v851 = vsel %vm442, %v846, %v848
        %v852 = vsel %vm442, %v848, %v441
        %857 = vst [vmem:[#allocation2 + $0xe0] sm:$0xff] %v849
        %858 = vst [vmem:[#allocation2 + $0xe8] sm:$0xff] %v850
        %859 = vst [vmem:[#allocation2 + $0xf0] sm:$0xff] %v851
        %860 = vst [vmem:[#allocation2 + $0xf8] sm:$0xff] %v852
        %861 = vrot.lane.b32.xlu0 %v709, 107
        %v862 = vpop.permute.xlu0 %861
        %863 = vrot.lane.b32.xlu0 %v710, 107
        %v864 = vpop.permute.xlu0 %863
        %865 = vrot.lane.b32.xlu0 %v711, 107
        %v866 = vpop.permute.xlu0 %865
        %867 = vrot.lane.b32.xlu0 %v712, 107
        %v868 = vpop.permute.xlu0 %867
        %v869 = vsel %vm465, %v862, %v864
        %v870 = vsel %vm465, %v864, %v866
        %v871 = vsel %vm465, %v866, %v868
        %v872 = vsel %vm465, %v868, %v464
        %877 = vst [vmem:[#allocation2 + $0x100] sm:$0xff] %v869
        %878 = vst [vmem:[#allocation2 + $0x108] sm:$0xff] %v870
        %879 = vst [vmem:[#allocation2 + $0x110] sm:$0xff] %v871
        %880 = vst [vmem:[#allocation2 + $0x118] sm:$0xff] %v872
        %v881 = vld [vmem:[%s4] sm:$0xff]
        %v882 = vld [vmem:[#allocation2] sm:$0xff]
        %v883 = vld [vmem:[#allocation2 + $0x8] sm:$0xff]
        %v884 = vld [vmem:[#allocation2 + $0x10] sm:$0xff]
        %v885 = vld [vmem:[#allocation2 + $0x18] sm:$0xff]
        %v886 = vld [vmem:[#allocation2 + $0x20] sm:$0xff]
        %v887 = vld [vmem:[#allocation2 + $0x28] sm:$0xff]
        %v888 = vld [vmem:[#allocation2 + $0x30] sm:$0xff]
        %v889 = vld [vmem:[#allocation2 + $0x38] sm:$0xff]
        %v890 = vld [vmem:[#allocation2 + $0x40] sm:$0xff]
        %v891 = vld [vmem:[#allocation2 + $0x48] sm:$0xff]
        %v892 = vld [vmem:[#allocation2 + $0x50] sm:$0xff]
        %v893 = vld [vmem:[#allocation2 + $0x58] sm:$0xff]
        %v894 = vld [vmem:[#allocation2 + $0x60] sm:$0xff]
        %v895 = vld [vmem:[#allocation2 + $0x68] sm:$0xff]
        %v896 = vld [vmem:[#allocation2 + $0x70] sm:$0xff]
        %v897 = vld [vmem:[#allocation2 + $0x78] sm:$0xff]
        %v898 = vld [vmem:[#allocation2 + $0x80] sm:$0xff]
        %v899 = vld [vmem:[#allocation2 + $0x88] sm:$0xff]
        %v900 = vld [vmem:[#allocation2 + $0x90] sm:$0xff]
        %v901 = vld [vmem:[#allocation2 + $0x98] sm:$0xff]
        %v902 = vld [vmem:[#allocation2 + $0xa0] sm:$0xff]
        %v903 = vld [vmem:[#allocation2 + $0xa8] sm:$0xff]
        %v904 = vld [vmem:[#allocation2 + $0xb0] sm:$0xff]
        %v905 = vld [vmem:[#allocation2 + $0xb8] sm:$0xff]
        %v906 = vld [vmem:[#allocation2 + $0xc0] sm:$0xff]
        %v907 = vld [vmem:[#allocation2 + $0xc8] sm:$0xff]
        %v908 = vld [vmem:[#allocation2 + $0xd0] sm:$0xff]
        %v909 = vld [vmem:[#allocation2 + $0xd8] sm:$0xff]
        %v910 = vld [vmem:[#allocation2 + $0xe0] sm:$0xff]
        %v911 = vld [vmem:[#allocation2 + $0xe8] sm:$0xff]
        %v912 = vld [vmem:[#allocation2 + $0xf0] sm:$0xff]
        %v913 = vld [vmem:[#allocation2 + $0xf8] sm:$0xff]
        %v914 = vld [vmem:[#allocation2 + $0x100] sm:$0xff]
        %v915 = vld [vmem:[#allocation2 + $0x108] sm:$0xff]
        %v916 = vld [vmem:[#allocation2 + $0x110] sm:$0xff]
        %v917 = vld [vmem:[#allocation2 + $0x118] sm:$0xff]
        %v919 = vsel %vm515, %v881, 0
        %921 = vmatprep.subr.mxu0 0.0
        %922 = vmatpush1.msra.mxu0 0.0
        %923 = vmatprep.subr.mxu0 0.0
        %924 = vmatpush1.msra.mxu0 0.0
        %925 = vmatprep.subr.mxu0 0.0
        %926 = vmatpush1.msra.mxu0 0.0
        %927 = vmatprep.subr.mxu0 0.0
        %928 = vmatpush1.msra.mxu0 0.0
        %929 = vmatprep.subr.mxu0 0.0
        %930 = vmatpush1.msra.mxu0 0.0
        %931 = vmatprep.subr.mxu0 0.0
        %932 = vmatpush1.msra.mxu0 0.0
        %933 = vmatprep.subr.mxu0 0.0
        %934 = vmatpush1.msra.mxu0 0.0
        %935 = vmatprep.subr.mxu0 %v915
        %936 = vmatpush1.msra.mxu0 %v914
        %937 = vmatprep.subr.mxu0 %v911
        %938 = vmatpush1.msra.mxu0 %v910
        %939 = vmatprep.subr.mxu0 %v907
        %940 = vmatpush1.msra.mxu0 %v906
        %941 = vmatprep.subr.mxu0 %v903
        %942 = vmatpush1.msra.mxu0 %v902
        %943 = vmatprep.subr.mxu0 %v899
        %944 = vmatpush1.msra.mxu0 %v898
        %945 = vmatprep.subr.mxu0 %v895
        %946 = vmatpush1.msra.mxu0 %v894
        %947 = vmatprep.subr.mxu0 %v891
        %948 = vmatpush1.msra.mxu0 %v890
        %949 = vmatprep.subr.mxu0 %v887
        %950 = vmatpush1.msra.mxu0 %v886
        %951 = vmatprep.subr.mxu0 %v883
        %952 = vmatpush1.msra.mxu0 %v882
        %953 = vmatprep.subr.mxu0 0.0
        %954 = vmatpush2.msra.mxu0 0.0
        %955 = vmatprep.subr.mxu0 0.0
        %956 = vmatpush2.msra.mxu0 0.0
        %957 = vmatprep.subr.mxu0 0.0
        %958 = vmatpush2.msra.mxu0 0.0
        %959 = vmatprep.subr.mxu0 0.0
        %960 = vmatpush2.msra.mxu0 0.0
        %961 = vmatprep.subr.mxu0 0.0
        %962 = vmatpush2.msra.mxu0 0.0
        %963 = vmatprep.subr.mxu0 0.0
        %964 = vmatpush2.msra.mxu0 0.0
        %965 = vmatprep.subr.mxu0 0.0
        %966 = vmatpush2.msra.mxu0 0.0
        %967 = vmatprep.subr.mxu0 0.0
        %968 = vmatpush2.msra.mxu0 0.0
        %969 = vmatprep.subr.mxu0 0.0
        %970 = vmatpush2.msra.mxu0 0.0
        %971 = vmatprep.subr.mxu0 0.0
        %972 = vmatpush2.msra.mxu0 0.0
        %973 = vmatprep.subr.mxu0 0.0
        %974 = vmatpush2.msra.mxu0 0.0
        %975 = vmatprep.subr.mxu0 0.0
        %976 = vmatpush2.msra.mxu0 0.0
        %977 = vmatprep.subr.mxu0 0.0
        %978 = vmatpush2.msra.mxu0 0.0
        %979 = vmatprep.subr.mxu0 0.0
        %980 = vmatpush2.msra.mxu0 0.0
        %981 = vmatprep.subr.mxu0 0.0
        %982 = vmatpush2.msra.mxu0 0.0
        %983 = vmatprep.subr.mxu0 0.0
        %984 = vmatpush2.msra.mxu0 0.0
        %985 = vmatprep.mubr.f32.mxu0 0.0
        %986 = vmatmul.mubr.f32.gmra.mxu0 %v919
        %v987 = vpop.f32.mrf.mxu0
        %v988 = vadd.f32 0.0, %v987
        %v989 = vpop.f32.mrf.mxu0
        %v990 = vadd.f32 0.0, %v989
        %991 = vdwg.mxu0
        %992 = vmatprep.subr.mxu0 0.0
        %993 = vmatpush1.msra.mxu0 0.0
        %994 = vmatprep.subr.mxu0 0.0
        %995 = vmatpush1.msra.mxu0 0.0
        %996 = vmatprep.subr.mxu0 0.0
        %997 = vmatpush1.msra.mxu0 0.0
        %998 = vmatprep.subr.mxu0 0.0
        %999 = vmatpush1.msra.mxu0 0.0
        %1000 = vmatprep.subr.mxu0 0.0
        %1001 = vmatpush1.msra.mxu0 0.0
        %1002 = vmatprep.subr.mxu0 0.0
        %1003 = vmatpush1.msra.mxu0 0.0
        %1004 = vmatprep.subr.mxu0 0.0
        %1005 = vmatpush1.msra.mxu0 0.0
        %1006 = vmatprep.subr.mxu0 %v917
        %1007 = vmatpush1.msra.mxu0 %v916
        %1008 = vmatprep.subr.mxu0 %v913
        %1009 = vmatpush1.msra.mxu0 %v912
        %1010 = vmatprep.subr.mxu0 %v909
        %1011 = vmatpush1.msra.mxu0 %v908
        %1012 = vmatprep.subr.mxu0 %v905
        %1013 = vmatpush1.msra.mxu0 %v904
        %1014 = vmatprep.subr.mxu0 %v901
        %1015 = vmatpush1.msra.mxu0 %v900
        %1016 = vmatprep.subr.mxu0 %v897
        %1017 = vmatpush1.msra.mxu0 %v896
        %1018 = vmatprep.subr.mxu0 %v893
        %1019 = vmatpush1.msra.mxu0 %v892
        %1020 = vmatprep.subr.mxu0 %v889
        %1021 = vmatpush1.msra.mxu0 %v888
        %1022 = vmatprep.subr.mxu0 %v885
        %1023 = vmatpush1.msra.mxu0 %v884
        %1024 = vmatprep.subr.mxu0 0.0
        %1025 = vmatpush2.msra.mxu0 0.0
        %1026 = vmatprep.subr.mxu0 0.0
        %1027 = vmatpush2.msra.mxu0 0.0
        %1028 = vmatprep.subr.mxu0 0.0
        %1029 = vmatpush2.msra.mxu0 0.0
        %1030 = vmatprep.subr.mxu0 0.0
        %1031 = vmatpush2.msra.mxu0 0.0
        %1032 = vmatprep.subr.mxu0 0.0
        %1033 = vmatpush2.msra.mxu0 0.0
        %1034 = vmatprep.subr.mxu0 0.0
        %1035 = vmatpush2.msra.mxu0 0.0
        %1036 = vmatprep.subr.mxu0 0.0
        %1037 = vmatpush2.msra.mxu0 0.0
        %1038 = vmatprep.subr.mxu0 0.0
        %1039 = vmatpush2.msra.mxu0 0.0
        %1040 = vmatprep.subr.mxu0 0.0
        %1041 = vmatpush2.msra.mxu0 0.0
        %1042 = vmatprep.subr.mxu0 0.0
        %1043 = vmatpush2.msra.mxu0 0.0
        %1044 = vmatprep.subr.mxu0 0.0
        %1045 = vmatpush2.msra.mxu0 0.0
        %1046 = vmatprep.subr.mxu0 0.0
        %1047 = vmatpush2.msra.mxu0 0.0
        %1048 = vmatprep.subr.mxu0 0.0
        %1049 = vmatpush2.msra.mxu0 0.0
        %1050 = vmatprep.subr.mxu0 0.0
        %1051 = vmatpush2.msra.mxu0 0.0
        %1052 = vmatprep.subr.mxu0 0.0
        %1053 = vmatpush2.msra.mxu0 0.0
        %1054 = vmatprep.subr.mxu0 0.0
        %1055 = vmatpush2.msra.mxu0 0.0
        %1056 = vmatprep.mubr.f32.mxu0 0.0
        %1057 = vmatmul.mubr.f32.gmra.mxu0 %v919
        %v1058 = vpop.f32.mrf.mxu0
        %v1059 = vadd.f32 0.0, %v1058
        %v1060 = vpop.f32.mrf.mxu0
        %v1061 = vadd.f32 0.0, %v1060
        %1062 = vdwg.mxu0
        %1063 = vst [vmem:[#allocation3] sm:$0xff] %v988
        %1064 = vst [vmem:[#allocation3 + $0x8] sm:$0xff] %v990
        %1065 = vst [vmem:[#allocation3 + $0x10] sm:$0xff] %v1059
        %1066 = vst [vmem:[#allocation3 + $0x18] sm:$0xff] %v1061
        %v1067 = vld [vmem:[#allocation3] sm:$0xff]
        %v1068 = vld [vmem:[#allocation3 + $0x8] sm:$0xff]
        %v1069 = vld [vmem:[#allocation3 + $0x10] sm:$0xff]
        %v1070 = vld [vmem:[#allocation3 + $0x18] sm:$0xff]
        %v1071 = vld [vmem:[%s5] sm:$0xff]
        %1073 = vset.pattern.permute.xlu0 0
        %1074 = vperm.xlu0 %1073, %v1071
        %v1075 = vpop.permute.xlu0 %1074
        %v1077 = vadd.f32 %v1067, %v1075
        %v1078 = vadd.f32 %v1068, %v1075
        %v1079 = vadd.f32 %v1069, %v1075
        %v1080 = vadd.f32 %v1070, %v1075
        %v1081 = vld [vmem:[%s248] sm:$0xff]
        %v1082 = vld [vmem:[%s248 + $0x8] sm:$0xff]
        %v1083 = vld [vmem:[%s248 + $0x10] sm:$0xff]
        %v1084 = vld [vmem:[%s248 + $0x18] sm:$0xff]
        %v1085 = vadd.f32 %v1077, %v1081
        %v1086 = vadd.f32 %v1078, %v1082
        %v1087 = vadd.f32 %v1079, %v1083
        %v1088 = vadd.f32 %v1080, %v1084
        %1089 = vst [vmem:[%s280] sm:$0xff] %v1085
        %1090 = vst [vmem:[%s280 + $0x8] sm:$0xff] %v1086
        %1091 = vst [vmem:[%s280 + $0x10] sm:$0xff] %v1087
        %1092 = vst [vmem:[%s280 + $0x18] sm:$0xff] %v1088
        %s1093 = sand.u32 %s163, 1
        %s1094 = scalar_lea.sflag [#allocation6], %s1093
        %s1095 = sand.u32 %s163, 1
        %s1096 = smul.addr %s1095, 32
        %s1097 = scalar_lea.vmem [#allocation9], %s1096
        // Predicated region
        $region53: #{tpu_custom_call.1} parent=43 // pred_check
          %p1098 = pneg %p173
        $region54: #{tpu_custom_call.1} parent=43 // pred_check_branch
          %1100 = sbr.rel (%p1098) target = $region56
        $region55: #{tpu_custom_call.1} parent=43 // pred_region
          %s1102 = ssub.s32 512, 512
          %1103 = vsyncadd %s1094, %s1102
          %s1104 = smul.addr %s24, 4
          %s1105 = smul.addr %s1104, 128
          %s1106 = scalar_lea.hbm %s6, %s1105
          %s1108 = sshll.u32 %s1097, 4
          %s1109 = int_to_ptr.vmem [resolvable:$true] %s1108
          %1111 = dma.vmem_to_hbm [thread:$0]  %s1109, 512, %s1106, %s1094
        $region56: #{tpu_custom_call.1} parent=43 // pred_fallthru
          _
      $region44: #{tpu_custom_call.1} parent=5 // pred_fallthru
        _
      %p1112 = scmp.le.s32.totalorder 2, %s19
      // Predicated region
      $region57: #{tpu_custom_call.1} parent=5 // pred_check
        %p1113 = pneg %p1112
      $region58: #{tpu_custom_call.1} parent=5 // pred_check_branch
        %1115 = sbr.rel (%p1113) target = $region60
      $region59: #{tpu_custom_call.1} parent=5 // pred_region
        %s1116 = ssub.s32 %s19, 2
        // Predicated region
        $region61: #{tpu_custom_call.1} parent=59 // pred_check
          %p1117 = pneg %p179
        $region62: #{tpu_custom_call.1} parent=59 // pred_check_branch
          %1119 = sbr.rel (%p1117) target = $region64
        $region63: #{tpu_custom_call.1} parent=59 // pred_region
          %s1120 = sand.u32 %s164, 1
          %s1121 = scalar_lea.sflag [#allocation6], %s1120
          %s1122 = sand.u32 %s164, 1
          %s1123 = smul.addr %s1122, 32
          %s1124 = scalar_lea.vmem [#allocation9], %s1123
          %1125 = dma.done %s1121, 512
        $region64: #{tpu_custom_call.1} parent=59 // pred_fallthru
          _
      $region60: #{tpu_custom_call.1} parent=5 // pred_fallthru
        _
    $region6: #{tpu_custom_call.1} parent=1 // loop_footer
      %s23 = sadd.s32 1, %s19
    $region7: #{tpu_custom_call.1} parent=1 // loop_footer_branch
      %18 = sbr.rel target = $region3
    $region8: #{tpu_custom_call.1} parent=1 // loop_exit
      _
    %1126 = vsyncpa [#allocation5], 1
    %s1127 = scalar_lea.sflag [#allocation5], 1
    %1128 = vsyncpa %s1127, 1
    %1129 = vsyncpa [#allocation8], 1
    %1130 = vsyncpa [#allocation6], 1
    %s1131 = scalar_lea.sflag [#allocation6], 1
    %1132 = vsyncpa %s1131, 1

</llo_original>
